<compile_context>
chip_gen: v6e
topology: v6e:2x2x1
jax: 0.10.0
libtpu: 0.0.40
codegen_flags: <defaults>
</compile_context>

<pallas_src>
import functools

import numpy as np
import jax
import jax.numpy as jnp
from jax import lax
from jax.experimental import pallas as pl
from jax.experimental.pallas import tpu as pltpu


# --------------------------- device-aware VMEM budget ---------------------------

def _vmem_limit_bytes():
    # v7x has 64 MiB VMEM per TensorCore, v5e/v6e 128 MiB; keep ~25% headroom for
    # compiler scratch / double buffers instead of hard-coding one limit.
    try:
        cap = int(pltpu.get_tpu_info().vmem_capacity_bytes)
    except Exception:
        cap = 64 * 1024 * 1024
    return int(min(cap * 3 // 4, 100 * 1024 * 1024))


_VMEM_LIMIT_BYTES = _vmem_limit_bytes()


def _compiler_params(dims=None):
    if dims is None:
        return pltpu.CompilerParams(vmem_limit_bytes=_VMEM_LIMIT_BYTES)
    return pltpu.CompilerParams(dimension_semantics=tuple(dims),
                                vmem_limit_bytes=_VMEM_LIMIT_BYTES)


def _round_up(x, m):
    return (x + m - 1) // m * m


def _elem_block_m(M, C):
    # ~2 MiB of f32 per (tm, C) activation block, multiple of 8 sublanes, <= 1024 rows.
    tm = (1 << 19) // max(C, 1)
    tm = max(8, min(1024, (tm // 8) * 8))
    return min(tm, _round_up(M, 8))


# ------------------------------ tiled matmul (MXU) ------------------------------

def _matmul_kernel(a_ref, b_ref, o_ref, acc_ref):
    @pl.when(pl.program_id(2) == 0)
    def _init():
        acc_ref[...] = jnp.zeros_like(acc_ref)

    acc_ref[...] += jnp.dot(a_ref[...], b_ref[...],
                            preferred_element_type=jnp.float32)

    @pl.when(pl.program_id(2) == pl.num_programs(2) - 1)
    def _store():
        o_ref[...] = acc_ref[...].astype(o_ref.dtype)


def _pick_tk(K):
    if K % 128 == 0:
        m = K // 128
        for d in (4, 3, 2, 1):
            if m % d == 0:
                return 128 * d
    return K  # whole-K in one reduction step (block dim == full array dim is allowed)


@functools.lru_cache(maxsize=None)
def _build_matmul(M, K, N):
    tm = min(256, _round_up(M, 8))
    tn = min(256, N) if N % 128 == 0 else N   # lane-dense output tiles where possible
    tk = _pick_tk(K)
    grid = (pl.cdiv(M, tm), pl.cdiv(N, tn), K // tk)
    call = pl.pallas_call(
        _matmul_kernel,
        out_shape=jax.ShapeDtypeStruct((M, N), jnp.float32),
        grid_spec=pltpu.PrefetchScalarGridSpec(
            num_scalar_prefetch=0,
            grid=grid,
            in_specs=[pl.BlockSpec((tm, tk), lambda i, j, k: (i, k)),
                      pl.BlockSpec((tk, tn), lambda i, j, k: (k, j))],
            out_specs=pl.BlockSpec((tm, tn), lambda i, j, k: (i, j)),
            scratch_shapes=[pltpu.VMEM((tm, tn), jnp.float32)],
        ),
        compiler_params=_compiler_params(("parallel", "parallel", "arbitrary")),
    )
    return jax.jit(call)


def pallas_matmul(a, b):
    """a: (M, K) bf16, b: (K, N) bf16 -> (M, N) f32, tiled MXU matmul."""
    M, K = a.shape
    N = b.shape[1]
    return _build_matmul(M, K, N)(a, b)


# -------------------------- BatchNorm (two-pass, fused) --------------------------

def _bn_stats_kernel(x_ref, sum_ref, sq_ref, *, block_m, m_total):
    i = pl.program_id(0)

    @pl.when(i == 0)
    def _init():
        sum_ref[...] = jnp.zeros_like(sum_ref)
        sq_ref[...] = jnp.zeros_like(sq_ref)

    x = x_ref[...].astype(jnp.float32)
    rows = i * block_m + lax.broadcasted_iota(jnp.int32, x.shape, 0)
    x = jnp.where(rows < m_total, x, 0.0)           # mask the ragged last tile
    sum_ref[...] += jnp.sum(x, axis=0, keepdims=True)
    sq_ref[...] += jnp.sum(x * x, axis=0, keepdims=True)


@functools.lru_cache(maxsize=None)
def _build_bn_stats(M, C):
    tm = _elem_block_m(M, C)
    call = pl.pallas_call(
        functools.partial(_bn_stats_kernel, block_m=tm, m_total=M),
        out_shape=(jax.ShapeDtypeStruct((1, C), jnp.float32),
                   jax.ShapeDtypeStruct((1, C), jnp.float32)),
        grid_spec=pltpu.PrefetchScalarGridSpec(
            num_scalar_prefetch=0,
            grid=(pl.cdiv(M, tm),),
            in_specs=[pl.BlockSpec((tm, C), lambda i: (i, 0))],
            out_specs=[pl.BlockSpec((1, C), lambda i: (0, 0)),
                       pl.BlockSpec((1, C), lambda i: (0, 0))],
        ),
        compiler_params=_compiler_params(("arbitrary",)),
    )
    return jax.jit(call)


def _bn_apply_kernel(x_ref, scale_ref, shift_ref, o_ref, *, relu):
    y = x_ref[...].astype(jnp.float32) * scale_ref[...] + shift_ref[...]
    if relu:
        y = jnp.maximum(y, 0.0)
    o_ref[...] = y.astype(o_ref.dtype)


def _bn_apply_residual_kernel(x_ref, scale_ref, shift_ref, res_ref, o_ref):
    y = (x_ref[...].astype(jnp.float32) * scale_ref[...] + shift_ref[...]
         + res_ref[...].astype(jnp.float32))
    o_ref[...] = jnp.maximum(y, 0.0).astype(o_ref.dtype)


@functools.lru_cache(maxsize=None)
def _build_bn_apply(M, C, relu, with_residual):
    tm = _elem_block_m(M, C)
    x_spec = pl.BlockSpec((tm, C), lambda i: (i, 0))
    v_spec = pl.BlockSpec((1, C), lambda i: (0, 0))
    if with_residual:
        kernel = _bn_apply_residual_kernel
        in_specs = [x_spec, v_spec, v_spec, x_spec]
    else:
        kernel = functools.partial(_bn_apply_kernel, relu=relu)
        in_specs = [x_spec, v_spec, v_spec]
    call = pl.pallas_call(
        kernel,
        out_shape=jax.ShapeDtypeStruct((M, C), jnp.bfloat16),
        grid_spec=pltpu.PrefetchScalarGridSpec(
            num_scalar_prefetch=0,
            grid=(pl.cdiv(M, tm),),
            in_specs=in_specs,
            out_specs=pl.BlockSpec((tm, C), lambda i: (i, 0)),
        ),
        compiler_params=_compiler_params(("parallel",)),
    )
    return jax.jit(call)


def pallas_batchnorm(x_nhwc, gamma, beta, relu, residual=None, eps=1e-5):
    """Training-mode BatchNorm (batch statistics) + optional ReLU; optionally fused with a
    residual add + ReLU (used for bn3 of every bottleneck block). Input f32, output bf16."""
    N, H, W, C = x_nhwc.shape
    M = N * H * W
    x2 = x_nhwc.reshape(M, C)
    sums, sqs = _build_bn_stats(M, C)(x2)
    mean = sums / M
    var = jnp.maximum(sqs / M - mean * mean, 0.0)    # biased variance (training mode)
    scale = gamma * lax.rsqrt(var + eps)
    shift = beta - mean * scale
    if residual is None:
        out = _build_bn_apply(M, C, relu, False)(x2, scale, shift)
    else:
        out = _build_bn_apply(M, C, True, True)(x2, scale, shift, residual.reshape(M, C))
    return out.reshape(N, H, W, C)


# --------------------------------- MaxPool2d(3,2) --------------------------------

def _maxpool9_kernel(p0, p1, p2, p3, p4, p5, p6, p7, p8, o_ref):
    m = p0[...]
    for r in (p1, p2, p3, p4, p5, p6, p7, p8):
        m = jnp.maximum(m, r[...])
    o_ref[...] = m


@functools.lru_cache(maxsize=None)
def _build_maxpool9(M, C):
    tm = _elem_block_m(M, C)
    spec = pl.BlockSpec((tm, C), lambda i: (i, 0))
    call = pl.pallas_call(
        _maxpool9_kernel,
        out_shape=jax.ShapeDtypeStruct((M, C), jnp.bfloat16),
        grid_spec=pltpu.PrefetchScalarGridSpec(
            num_scalar_prefetch=0,
            grid=(pl.cdiv(M, tm),),
            in_specs=[spec] * 9,
            out_specs=spec,
        ),
        compiler_params=_compiler_params(("parallel",)),
    )
    return jax.jit(call)


def maxpool2d(x_nhwc, k=3, s=2):
    assert k == 3
    N, H, W, C = x_nhwc.shape
    Ho = (H - k) // s + 1
    Wo = (W - k) // s + 1
    M = N * Ho * Wo
    patches = [x_nhwc[:, i:i + s * Ho:s, j:j + s * Wo:s, :].reshape(M, C)
               for i in range(k) for j in range(k)]
    out = _build_maxpool9(M, C)(*patches)
    return out.reshape(N, Ho, Wo, C)


# --------------------- fused head: avgpool + FC + softmax ------------------------

def _head_kernel(x_ref, w_ref, b_ref, o_ref):
    pooled = jnp.mean(x_ref[...].astype(jnp.float32), axis=1)   # AdaptiveAvgPool2d((1,1))
    logits = jnp.dot(pooled, w_ref[...],
                     preferred_element_type=jnp.float32) + b_ref[...]
    m = jnp.max(logits, axis=-1, keepdims=True)                 # Softmax(dim=1)
    e = jnp.exp(logits - m)
    o_ref[...] = e / jnp.sum(e, axis=-1, keepdims=True)


@functools.lru_cache(maxsize=None)
def _build_head(N, HW, C, num_classes):
    call = pl.pallas_call(
        _head_kernel,
        out_shape=jax.ShapeDtypeStruct((N, num_classes), jnp.float32),
        compiler_params=_compiler_params(),
    )
    return jax.jit(call)


def pallas_head(x_nhwc, fc_w, fc_b):
    N, H, W, C = x_nhwc.shape
    num_classes = fc_w.shape[1]
    x3 = x_nhwc.reshape(N, H * W, C)
    return _build_head(N, H * W, C, num_classes)(x3, fc_w, fc_b.reshape(1, num_classes))


# ------------------------------- conv via im2col ---------------------------------

def conv2d(x_nhwc, w2d, kh, kw, stride=1, padding=0):
    """x_nhwc: bf16 NHWC activations; w2d: (K, Cout) bf16 weight (K lane-padded for kxk>1).
    Returns the raw (pre-BN) conv output in f32 NHWC. No conv bias: every conv in this net
    is followed by a batch-stat BatchNorm, which cancels a bias exactly."""
    N, H, W, C = x_nhwc.shape
    cout = w2d.shape[1]
    if padding:
        x_nhwc = jnp.pad(x_nhwc, ((0, 0), (padding, padding), (padding, padding), (0, 0)))
    Hp, Wp = H + 2 * padding, W + 2 * padding
    Ho = (Hp - kh) // stride + 1
    Wo = (Wp - kw) // stride + 1
    if kh == 1 and kw == 1:
        xs = x_nhwc if stride == 1 else x_nhwc[:, ::stride, ::stride, :]
        patches = xs[:, :Ho, :Wo, :].reshape(N * Ho * Wo, C)
    else:
        # TODO(synk): stream the kh*kw taps through the matmul K grid axis (index_map over
        # the padded NHWC tensor) instead of materializing the im2col matrix in HBM.
        cols = [x_nhwc[:, i:i + stride * Ho:stride, j:j + stride * Wo:stride, :]
                for i in range(kh) for j in range(kw)]
        k_actual = kh * kw * C
        k_weight = w2d.shape[0]
        if k_weight > k_actual:   # weight K was lane-padded to a multiple of 128 at init
            cols.append(jnp.zeros((N, Ho, Wo, k_weight - k_actual), x_nhwc.dtype))
        patches = jnp.concatenate(cols, axis=-1).reshape(N * Ho * Wo, k_weight)
    out = pallas_matmul(patches, w2d)
    return out.reshape(N, Ho, Wo, cout)


# ---------------------------------- parameters -----------------------------------

def init_conv(key, kh, kw, cin, cout):
    fan_in = kh * kw * cin
    w = jax.random.normal(key, (kh, kw, cin, cout), jnp.float32) / np.sqrt(fan_in)
    w2d = w.reshape(kh * kw * cin, cout)
    if kh * kw > 1 and (kh * kw * cin) % 128 != 0:
        # pad K to a lane-aligned multiple of 128 once at init; matched by a zero block
        # appended to the im2col patches (contributes nothing to the matmul).
        kpad = _round_up(kh * kw * cin, 128)
        w2d = jnp.zeros((kpad, cout), jnp.float32).at[:kh * kw * cin, :].set(w2d)
    return w2d.astype(jnp.bfloat16)


def init_bn(c):
    # PyTorch BatchNorm2d default init: weight = 1, bias = 0.
    return {"gamma": jnp.ones((1, c), jnp.float32), "beta": jnp.zeros((1, c), jnp.float32)}


def init_identity_block(key, cin, couts, conv):
    c1, c2, c3 = couts
    keys = jax.random.split(key, 4)
    p = {"stride": 2 if conv else 1,
         "conv1": init_conv(keys[0], 1, 1, cin, c1), "bn1": init_bn(c1),
         "conv2": init_conv(keys[1], 3, 3, c1, c2), "bn2": init_bn(c2),
         "conv3": init_conv(keys[2], 1, 1, c2, c3), "bn3": init_bn(c3)}
    if conv or cin != c3:
        p["conv_sc"] = init_conv(keys[3], 1, 1, cin, c3)
        p["bn_sc"] = init_bn(c3)
    return p


def init_resnet(key, num_classes, in_channels=3, variant="ResNet50"):
    layers = {"ResNet50": [2, 3, 5, 2],
              "ResNet101": [2, 3, 22, 2],
              "ResNet152": [2, 7, 35, 2]}[variant]
    ks = iter(jax.random.split(key, 64))
    params = {}
    params["conv1"] = init_conv(next(ks), 7, 7, in_channels, 64)
    params["conv1_bn"] = init_bn(64)
    params["id2_1"] = init_identity_block(next(ks), 64, [64, 64, 256], conv=False)
    params["layer2"] = [init_identity_block(next(ks), 256, [64, 64, 256], False)
                        for _ in range(layers[0])]
    params["id3_1"] = init_identity_block(next(ks), 256, [128, 128, 512], True)
    params["layer3"] = [init_identity_block(next(ks), 512, [128, 128, 512], False)
                        for _ in range(layers[1])]
    params["id4_1"] = init_identity_block(next(ks), 512, [256, 256, 1024], True)
    params["layer4"] = [init_identity_block(next(ks), 1024, [256, 256, 1024], False)
                        for _ in range(layers[2])]
    params["id5_1"] = init_identity_block(next(ks), 1024, [512, 512, 2048], True)
    params["layer5"] = [init_identity_block(next(ks), 2048, [512, 512, 2048], False)
                        for _ in range(layers[3])]
    params["fc_w"] = (jax.random.normal(next(ks), (2048, num_classes), jnp.float32)
                      / np.sqrt(2048))
    params["fc_b"] = jnp.zeros((num_classes,), jnp.float32)
    return params


# ---------------------------------- forward pass ----------------------------------

def identity_block_forward(x, p):
    s = p["stride"]
    out = conv2d(x, p["conv1"], 1, 1, stride=s, padding=0)
    out = pallas_batchnorm(out, p["bn1"]["gamma"], p["bn1"]["beta"], relu=True)
    out = conv2d(out, p["conv2"], 3, 3, stride=1, padding=1)
    out = pallas_batchnorm(out, p["bn2"]["gamma"], p["bn2"]["beta"], relu=True)
    out = conv2d(out, p["conv3"], 1, 1, stride=1, padding=0)
    if "conv_sc" in p:
        sc = conv2d(x, p["conv_sc"], 1, 1, stride=s, padding=0)
        sc = pallas_batchnorm(sc, p["bn_sc"]["gamma"], p["bn_sc"]["beta"], relu=False)
    else:
        sc = x
    # bn3 + residual add + ReLU fused into a single apply pass
    return pallas_batchnorm(out, p["bn3"]["gamma"], p["bn3"]["beta"],
                            relu=True, residual=sc)


def resnet_forward(params, x_nchw):
    x = jnp.transpose(x_nchw, (0, 2, 3, 1)).astype(jnp.bfloat16)   # NCHW -> NHWC, bf16 acts
    out = conv2d(x, params["conv1"], 7, 7, stride=2, padding=0)
    out = pallas_batchnorm(out, params["conv1_bn"]["gamma"],
                           params["conv1_bn"]["beta"], relu=True)
    out = maxpool2d(out, k=3, s=2)
    out = identity_block_forward(out, params["id2_1"])
    for p in params["layer2"]:
        out = identity_block_forward(out, p)
    out = identity_block_forward(out, params["id3_1"])
    for p in params["layer3"]:
        out = identity_block_forward(out, p)
    out = identity_block_forward(out, params["id4_1"])
    for p in params["layer4"]:
        out = identity_block_forward(out, p)
    out = identity_block_forward(out, params["id5_1"])
    for p in params["layer5"]:
        out = identity_block_forward(out, p)
    return pallas_head(out, params["fc_w"], params["fc_b"])


# -------------------------------------- main ---------------------------------------

if __name__ == "__main__":
    num_classes = 16
    key = jax.random.PRNGKey(0)
    pkey, xkey = jax.random.split(key)
    params = init_resnet(pkey, num_classes=num_classes, in_channels=3, variant="ResNet50")
    # small but valid input: 32x32 survives the un-padded 7x7/s2 conv and 3x3/s2 maxpool
    x = jax.random.normal(xkey, (2, 3, 32, 32), jnp.float32)      # NCHW, like PyTorch
    out = resnet_forward(params, x)
    out = jax.block_until_ready(out)
    assert out.shape == (2, num_classes)
    assert bool(jnp.all(jnp.isfinite(out)))
    assert bool(jnp.allclose(jnp.sum(out, axis=1), 1.0, atol=1e-3))   # softmax rows sum to 1
    print("KERNEL_OK")
</pallas_src>

<mosaic_0001>
module attributes {stable_mosaic.version = 11 : i64} {
  func.func @_matmul_kernel(%arg0: i32, %arg1: i32, %arg2: i32, %arg3: memref<256x256xbf16, #tpu.memory_space<vmem>>, %arg4: memref<256x64xbf16, #tpu.memory_space<vmem>>, %arg5: memref<256x64xf32, #tpu.memory_space<vmem>>, %arg6: memref<256x64xf32, #tpu.memory_space<vmem>>) attributes {dimension_semantics = [#tpu.dimension_semantics<parallel>, #tpu.dimension_semantics<parallel>, #tpu.dimension_semantics<arbitrary>], iteration_bounds = array<i64: 2, 1, 1>, scalar_prefetch = 0 : i64, scratch_operands = 1 : i64, tpu.core_type = #tpu.core_type<tc>, window_params = [{transform_indices = @transform_0, window_bounds = array<i64: 256, 256>}, {transform_indices = @transform_1, window_bounds = array<i64: 256, 64>}, {transform_indices = @transform_2, window_bounds = array<i64: 256, 64>}]} {
    %c0_i32 = arith.constant 0 : i32
    %0 = arith.cmpi eq, %arg2, %c0_i32 : i32
    %1 = arith.extui %0 : i1 to i32
    %c0_i32_0 = arith.constant 0 : i32
    %2 = arith.cmpi ne, %1, %c0_i32_0 : i32
    scf.if %2 {
      %cst_10 = arith.constant 0.000000e+00 : f32
      %12 = vector.broadcast %cst_10 : f32 to vector<256x64xf32>
      %c0_11 = arith.constant 0 : index
      %c0_12 = arith.constant 0 : index
      %13 = vector.load %arg6[%c0_11, %c0_12] : memref<256x64xf32, #tpu.memory_space<vmem>>, vector<256x64xf32>
      tpu.vector_store %arg6[%c0_11, %c0_12], %12 {strides = array<i32>} : memref<256x64xf32, #tpu.memory_space<vmem>>, vector<256x64xf32>,
    } else {
    }
    %c0 = arith.constant 0 : index
    %c0_1 = arith.constant 0 : index
    %3 = vector.load %arg6[%c0, %c0_1] : memref<256x64xf32, #tpu.memory_space<vmem>>, vector<256x64xf32>
    %c0_2 = arith.constant 0 : index
    %c0_3 = arith.constant 0 : index
    %4 = vector.load %arg3[%c0_2, %c0_3] : memref<256x256xbf16, #tpu.memory_space<vmem>>, vector<256x256xbf16>
    %c0_4 = arith.constant 0 : index
    %c0_5 = arith.constant 0 : index
    %5 = vector.load %arg4[%c0_4, %c0_5] : memref<256x64xbf16, #tpu.memory_space<vmem>>, vector<256x64xbf16>
    %cst = arith.constant dense<0.000000e+00> : vector<256x64xf32>
    %6 = tpu.matmul %4, %5, %cst {dimension_numbers = #tpu.dot_dimension_numbers<[1], [0], [0], [1], [0, 0, 1, 1], [], []>} : vector<256x256xbf16>, vector<256x64xbf16>, vector<256x64xf32> -> vector<256x64xf32>
    %7 = arith.addf %3, %6 : vector<256x64xf32>
    %c0_6 = arith.constant 0 : index
    %c0_7 = arith.constant 0 : index
    %8 = vector.load %arg6[%c0_6, %c0_7] : memref<256x64xf32, #tpu.memory_space<vmem>>, vector<256x64xf32>
    tpu.vector_store %arg6[%c0_6, %c0_7], %7 {strides = array<i32>} : memref<256x64xf32, #tpu.memory_space<vmem>>, vector<256x64xf32>,
    %c0_i32_8 = arith.constant 0 : i32
    %9 = arith.cmpi eq, %arg2, %c0_i32_8 : i32
    %10 = arith.extui %9 : i1 to i32
    %c0_i32_9 = arith.constant 0 : i32
    %11 = arith.cmpi ne, %10, %c0_i32_9 : i32
    scf.if %11 {
      %c0_10 = arith.constant 0 : index
      %c0_11 = arith.constant 0 : index
      %12 = vector.load %arg6[%c0_10, %c0_11] : memref<256x64xf32, #tpu.memory_space<vmem>>, vector<256x64xf32>
      %c0_12 = arith.constant 0 : index
      %c0_13 = arith.constant 0 : index
      %13 = vector.load %arg5[%c0_12, %c0_13] : memref<256x64xf32, #tpu.memory_space<vmem>>, vector<256x64xf32>
      tpu.vector_store %arg5[%c0_12, %c0_13], %12 {strides = array<i32>} : memref<256x64xf32, #tpu.memory_space<vmem>>, vector<256x64xf32>,
    } else {
    }
    return
  }
  func.func @transform_0(%arg0: i32, %arg1: i32, %arg2: i32) -> (i32, i32) {
    %c0_i32 = arith.constant 0 : i32
    return %arg0, %arg2 : i32, i32
  }
  func.func @transform_1(%arg0: i32, %arg1: i32, %arg2: i32) -> (i32, i32) {
    %c0_i32 = arith.constant 0 : i32
    return %arg2, %arg1 : i32, i32
  }
  func.func @transform_2(%arg0: i32, %arg1: i32, %arg2: i32) -> (i32, i32) {
    %c0_i32 = arith.constant 0 : i32
    return %arg0, %arg1 : i32, i32
  }
}

</mosaic_0001>

<llo_original>
// kernel: tpu_custom_call.1
$region0: #{tpu_custom_call.1}
  #allocation0 [shape = 'u32[]', space=smem, size = 0x4, offset = 0x4, fixed_abs, tag = 'smem constant byte address 0x4 - core index']
  #allocation1 [shape = 'u32[144,128]{1,0:T(1,128)}', space=vmem, size = 0x12000, scoped, tag = 'internal scratch']
  #allocation2 [shape = 'f32[256,64]{1,0:T(8,128)}', space=vmem, size = 0x20000, scoped, tag = 'scratch operand']
  %s0 = inlined_call_operand.hbm [shape: bf16[338,256], index: 0, kind: input, shape index: {}]
  %s1 = inlined_call_operand.vmem [shape: bf16[256,64], index: 1, kind: input, shape index: {}]
  %s2 = inlined_call_operand.vmem [shape: f32[338,64], index: 2, kind: output, shape index: {}]
  %s3 = sld [smem:[#allocation0]]
  $region101: #{tpu_custom_call.1} parent=0
    _
  %s5 = ssub.s32 1, %s3
  %s6 = scalar_select 0, %s5, %s3
  $region1: #{tpu_custom_call.1} parent=0
    #allocation3 [shape = 'u8[262144]{0}', space=vmem, size = 0x40000, scoped, tag = 'input window, operand 0']
    #allocation4 [shape = 's32[2]{0}', space=sflag, size = 0x8, scoped, tag = 'scoped memory for tpu_custom_call.1']
    #allocation5 [shape = 'u8[262144]{0}', space=vmem, size = 0x40000, scoped, tag = 'output window, operand 0']
    %7 = vsyncpa [#allocation4], 0
    %s8 = scalar_lea.sflag [#allocation4], 1
    %9 = vsyncpa %s8, 0
    loop: start=0, step=1, limit=4
    $region2: #{tpu_custom_call.1} parent=1 // loop_pre_header
      _
    $region3: #{tpu_custom_call.1} parent=1 // loop_header
      %s11 = sphi 0, %s15
      %p12 = scmp.ge.s32.totalorder %s11, 4
      %s18 = sphi 0, %s37
      %s19 = sphi 0, %s33
      %s20 = sphi 0, %s29
      %s21 = sphi 0, %s18
      %s22 = sphi 0, %s19
      %s23 = sphi 0, %s20
      %s24 = sphi 0, %s21
      %s25 = sphi 0, %s22
      %s26 = sphi 0, %s23
      %s42 = sphi 0, %s44
      %s45 = sphi 0, %s42
      %s46 = sphi 0, %s45
      %s62 = sphi 0, %s46
      %s70 = sphi 0, %s72
      %s73 = sphi 0, %s70
      %s74 = sphi 0, %s73
      %s90 = sphi 0, %s74
      %s98 = sphi 0, %s100
      %s101 = sphi 0, %s98
      %s102 = sphi 0, %s101
      %s118 = sphi 0, %s102
    $region4: #{tpu_custom_call.1} parent=1 // loop_header_branch
      %14 = sbr.rel (%p12) target = $region8
    $region5: #{tpu_custom_call.1} parent=1 // loop_body
      %s16 = ssub.s32 %s11, 1
      %s17 = ssub.s32 %s11, 2
      %s27 = sadd.s32 1, %s20
      %p28 = scmp.ge.s32.totalorder %s27, 1
      %s29 = scalar_select %p28, 0, %s27
      %s30 = sadd.s32 1, %s19
      %s31 = scalar_select %p28, %s30, %s19
      %p32 = scmp.ge.s32.totalorder %s31, 1
      %s33 = scalar_select %p32, 0, %s31
      %s34 = sadd.s32 1, %s18
      %s35 = scalar_select %p32, %s34, %s18
      %p36 = scmp.ge.s32.totalorder %s35, 2
      %s37 = scalar_select %p36, 0, %s35
      %s38 = ssub.s32 %s18, %s37
      %s39 = ssub.s32 %s20, %s29
      %s40 = sor.u32 %s38, %s39
      %p41 = scmp.eq.s32.totalorder %s40, 0
      %s43 = sadd.s32 %s42, 1
      %s44 = scalar_select %p41, %s42, %s43
      %p47 = pneg %p41
      %p48 = scmp.eq.s32.totalorder %s11, 1
      %p49 = por %p47, %p48
      %p50 = scmp.ne.s32.totalorder %s42, %s45
      %p51 = scmp.eq.s32.totalorder %s11, 0
      %p52 = por %p50, %p51
      %p53 = scmp.ne.s32.totalorder %s42, %s45
      %p54 = scmp.eq.s32.totalorder %s16, 1
      %p55 = por %p53, %p54
      %p56 = scmp.ne.s32.totalorder %s45, %s46
      %p57 = scmp.eq.s32.totalorder %s16, 0
      %p58 = por %p56, %p57
      %p59 = scmp.ne.s32.totalorder %s45, %s46
      %p60 = scmp.eq.s32.totalorder %s17, 1
      %p61 = por %p59, %p60
      %p63 = scmp.ne.s32.totalorder %s46, %s62
      %p64 = scmp.eq.s32.totalorder %s17, 0
      %p65 = por %p63, %p64
      %s66 = ssub.s32 %s20, %s29
      %s67 = ssub.s32 %s19, %s33
      %s68 = sor.u32 %s66, %s67
      %p69 = scmp.eq.s32.totalorder %s68, 0
      %s71 = sadd.s32 %s70, 1
      %s72 = scalar_select %p69, %s70, %s71
      %p75 = pneg %p69
      %p76 = scmp.eq.s32.totalorder %s11, 1
      %p77 = por %p75, %p76
      %p78 = scmp.ne.s32.totalorder %s70, %s73
      %p79 = scmp.eq.s32.totalorder %s11, 0
      %p80 = por %p78, %p79
      %p81 = scmp.ne.s32.totalorder %s70, %s73
      %p82 = scmp.eq.s32.totalorder %s16, 1
      %p83 = por %p81, %p82
      %p84 = scmp.ne.s32.totalorder %s73, %s74
      %p85 = scmp.eq.s32.totalorder %s16, 0
      %p86 = por %p84, %p85
      %p87 = scmp.ne.s32.totalorder %s73, %s74
      %p88 = scmp.eq.s32.totalorder %s17, 1
      %p89 = por %p87, %p88
      %p91 = scmp.ne.s32.totalorder %s74, %s90
      %p92 = scmp.eq.s32.totalorder %s17, 0
      %p93 = por %p91, %p92
      %s94 = ssub.s32 %s18, %s37
      %s95 = ssub.s32 %s19, %s33
      %s96 = sor.u32 %s94, %s95
      %p97 = scmp.eq.s32.totalorder %s96, 0
      %s99 = sadd.s32 %s98, 1
      %s100 = scalar_select %p97, %s98, %s99
      %p103 = pneg %p97
      %p104 = scmp.eq.s32.totalorder %s11, 1
      %p105 = por %p103, %p104
      %p106 = scmp.ne.s32.totalorder %s98, %s101
      %p107 = scmp.eq.s32.totalorder %s11, 0
      %p108 = por %p106, %p107
      %p109 = scmp.ne.s32.totalorder %s98, %s101
      %p110 = scmp.eq.s32.totalorder %s16, 1
      %p111 = por %p109, %p110
      %p112 = scmp.ne.s32.totalorder %s101, %s102
      %p113 = scmp.eq.s32.totalorder %s16, 0
      %p114 = por %p112, %p113
      %p115 = scmp.ne.s32.totalorder %s101, %s102
      %p116 = scmp.eq.s32.totalorder %s17, 1
      %p117 = por %p115, %p116
      %p119 = scmp.ne.s32.totalorder %s102, %s118
      %p120 = scmp.eq.s32.totalorder %s17, 0
      %p121 = por %p119, %p120
      %p122 = scmp.le.s32.totalorder 1, %s11
      %p123 = scmp.lt.s32.totalorder %s11, 3
      %p124 = pnand %p122, %p123
      %p125 = pneg %p124
      // Predicated region
      $region9: #{tpu_custom_call.1} parent=5 // pred_check
        _
      $region10: #{tpu_custom_call.1} parent=5 // pred_check_branch
        %127 = sbr.rel (%p124) target = $region12
      $region11: #{tpu_custom_call.1} parent=5 // pred_region
        %s128 = ssub.s32 %s11, 1
        // Predicated region
        $region13: #{tpu_custom_call.1} parent=11 // pred_check
          %p129 = pneg %p86
        $region14: #{tpu_custom_call.1} parent=11 // pred_check_branch
          %131 = sbr.rel (%p129) target = $region16
        $region15: #{tpu_custom_call.1} parent=11 // pred_region
          %s132 = smul.u32 32, %s23
          %p133 = scmp.lt.s32.totalorder %s132, 31
          %s134 = scalar_select %p133, %s132, 31
          %p135 = scmp.lt.s32.totalorder %s22, 0
          %s136 = scalar_select %p135, %s22, 0
          %s137 = sadd.s32 %s136, %s134
          %s138 = smul.addr %s137, 4
          %s139 = scalar_lea.vmem %s1, %s138
          %s140 = smul.u32 32, %s23
        $region16: #{tpu_custom_call.1} parent=11 // pred_fallthru
          _
      $region12: #{tpu_custom_call.1} parent=5 // pred_fallthru
        _
      %p141 = scmp.lt.s32.totalorder %s11, 2
      // Predicated region
      $region17: #{tpu_custom_call.1} parent=5 // pred_check
        %p142 = pneg %p141
      $region18: #{tpu_custom_call.1} parent=5 // pred_check_branch
        %144 = sbr.rel (%p142) target = $region20
      $region19: #{tpu_custom_call.1} parent=5 // pred_region
        // Predicated region
        $region21: #{tpu_custom_call.1} parent=19 // pred_check
          %p145 = pneg %p52
        $region22: #{tpu_custom_call.1} parent=19 // pred_check_branch
          %147 = sbr.rel (%p145) target = $region24
        $region23: #{tpu_custom_call.1} parent=19 // pred_region
          %s148 = sand.u32 %s42, 1
          %s149 = scalar_lea.sflag [#allocation4], %s148
          %s150 = sand.u32 %s42, 1
          %s151 = smul.addr %s150, 256
          %s152 = scalar_lea.vmem [#allocation3], %s151
          %s153 = smul.u32 32, %s18
          %s154 = smul.u32 2, %s20
          %s155 = ssub.s32 43, %s153
          %p156 = scmp.lt.s32.totalorder %s155, 32
          %s157 = scalar_select %p156, %s155, 32
          %s158 = smul.u32 64, %s157
          %s159 = smul.u32 %s158, 2
          %s161 = ssub.s32 4096, %s159
          %162 = vsyncadd %s149, %s161
          %p163 = scmp.ne.s32.totalorder 0, %s159
          %s164 = smul.addr %s153, 2
          %s165 = sadd.s32 %s154, %s164
          %s166 = smul.addr %s165, 64
          %s167 = scalar_lea.hbm %s0, %s166
          %s168 = smul.u32 8, %s157
          %s169 = sshll.u32 %s152, 4
          %s170 = int_to_ptr.vmem [resolvable:$true] %s169
          %s171 = sshll.u32 %s168, 4
          %175 = dma.hbm_to_vmem [thread:$0]  (%p163), %s167, %s171, %s170, %s149, 128, 128, 8
        $region24: #{tpu_custom_call.1} parent=19 // pred_fallthru
          _
      $region20: #{tpu_custom_call.1} parent=5 // pred_fallthru
        _
      %p176 = scmp.le.s32.totalorder 1, %s11
      %p177 = scmp.lt.s32.totalorder %s11, 3
      %p178 = pnand %p176, %p177
      %p179 = pneg %p178
      // Predicated region
      $region25: #{tpu_custom_call.1} parent=5 // pred_check
        _
      $region26: #{tpu_custom_call.1} parent=5 // pred_check_branch
        %181 = sbr.rel (%p178) target = $region28
      $region27: #{tpu_custom_call.1} parent=5 // pred_region
        %s182 = ssub.s32 %s11, 1
        %s183 = sand.u32 %s45, 1
        %s184 = scalar_lea.sflag [#allocation4], %s183
        %s185 = sand.u32 %s45, 1
        %s186 = smul.addr %s185, 256
        %s187 = scalar_lea.vmem [#allocation3], %s186
        // Predicated region
        $region29: #{tpu_custom_call.1} parent=27 // pred_check
          %p188 = pneg %p58
        $region30: #{tpu_custom_call.1} parent=27 // pred_check_branch
          %190 = sbr.rel (%p188) target = $region32
        $region31: #{tpu_custom_call.1} parent=27 // pred_region
          %191 = dma.done %s184, 4096
        $region32: #{tpu_custom_call.1} parent=27 // pred_fallthru
          _
        %s192 = sand.u32 %s45, 1
        %s193 = scalar_lea.sflag [#allocation4], %s192
        %s194 = sand.u32 %s45, 1
        %s195 = smul.addr %s194, 256
        %s196 = scalar_lea.vmem [#allocation3], %s195
        %p197 = pneg %p58
        %p198 = pneg %p55
        %s199 = smul.u32 32, %s23
        %p200 = scmp.lt.s32.totalorder %s199, 31
        %s201 = scalar_select %p200, %s199, 31
        %p202 = scmp.lt.s32.totalorder %s22, 0
        %s203 = scalar_select %p202, %s22, 0
        %s204 = sadd.s32 %s203, %s201
        %s205 = smul.addr %s204, 4
        %s206 = scalar_lea.vmem %s1, %s205
        %p207 = pneg %p86
        %p208 = pneg %p83
        %p209 = pneg %p114
        %p210 = pneg %p111
        %s211 = sand.u32 %s101, 1
        %s212 = sand.u32 %s101, 1
        %s213 = smul.addr %s212, 256
        %s214 = scalar_lea.vmem [#allocation5], %s213
        %s215 = smul.u32 32, %s21
        %s216 = smul.u32 2, %s23
        %s217 = ssub.s32 43, %s215
        %p218 = scmp.lt.s32.totalorder %s217, 32
        %s219 = scalar_select %p218, %s217, 32
        %s220 = smul.u32 64, %s219
        %s221 = smul.u32 %s220, 2
        %s222 = smul.u32 32, %s23
        %p223 = scmp.lt.s32.totalorder %s222, 31
        %s224 = scalar_select %p223, %s222, 31
        %p225 = scmp.lt.s32.totalorder %s22, 0
        %s226 = scalar_select %p225, %s22, 0
        %s227 = sadd.s32 %s226, %s224
        %s228 = smul.addr %s227, 4
        %s229 = scalar_lea.vmem %s1, %s228
        %s230 = smul.u32 32, %s23
        %s231 = smul.u32 32, %s21
        %s232 = ssub.s32 43, %s231
        %p233 = scmp.lt.s32.totalorder %s232, 32
        %s234 = scalar_select %p233, %s232, 32
        %s235 = smul.u32 128, %s234
        %p237 = scmp.eq.s32.totalorder %s23, 0
        // Predicated region
        $region33: #{tpu_custom_call.1} parent=27 // pred_check
          %p238 = pneg %p237
        $region34: #{tpu_custom_call.1} parent=27 // pred_check_branch
          %240 = sbr.rel (%p238) target = $region36
        $region35: #{tpu_custom_call.1} parent=27 // pred_region
          %vm241 = vcmask 523264
          %242 = vst.msk [vmem:[#allocation2] sm:$0xff] %vm241, 0.0
          %243 = vst.msk [vmem:[#allocation2 + $0x8] sm:$0xff] %vm241, 0.0
          %244 = vst.msk [vmem:[#allocation2 + $0x10] sm:$0xff] %vm241, 0.0
          %245 = vst.msk [vmem:[#allocation2 + $0x18] sm:$0xff] %vm241, 0.0
          %246 = vst.msk [vmem:[#allocation2 + $0x20] sm:$0xff] %vm241, 0.0
          %247 = vst.msk [vmem:[#allocation2 + $0x28] sm:$0xff] %vm241, 0.0
          %248 = vst.msk [vmem:[#allocation2 + $0x30] sm:$0xff] %vm241, 0.0
          %249 = vst.msk [vmem:[#allocation2 + $0x38] sm:$0xff] %vm241, 0.0
          %250 = vst.msk [vmem:[#allocation2 + $0x40] sm:$0xff] %vm241, 0.0
          %251 = vst.msk [vmem:[#allocation2 + $0x48] sm:$0xff] %vm241, 0.0
          %252 = vst.msk [vmem:[#allocation2 + $0x50] sm:$0xff] %vm241, 0.0
          %253 = vst.msk [vmem:[#allocation2 + $0x58] sm:$0xff] %vm241, 0.0
          %254 = vst.msk [vmem:[#allocation2 + $0x60] sm:$0xff] %vm241, 0.0
          %255 = vst.msk [vmem:[#allocation2 + $0x68] sm:$0xff] %vm241, 0.0
          %256 = vst.msk [vmem:[#allocation2 + $0x70] sm:$0xff] %vm241, 0.0
          %257 = vst.msk [vmem:[#allocation2 + $0x78] sm:$0xff] %vm241, 0.0
          %258 = vst.msk [vmem:[#allocation2 + $0x80] sm:$0xff] %vm241, 0.0
          %259 = vst.msk [vmem:[#allocation2 + $0x88] sm:$0xff] %vm241, 0.0
          %260 = vst.msk [vmem:[#allocation2 + $0x90] sm:$0xff] %vm241, 0.0
          %261 = vst.msk [vmem:[#allocation2 + $0x98] sm:$0xff] %vm241, 0.0
          %262 = vst.msk [vmem:[#allocation2 + $0xa0] sm:$0xff] %vm241, 0.0
          %263 = vst.msk [vmem:[#allocation2 + $0xa8] sm:$0xff] %vm241, 0.0
          %264 = vst.msk [vmem:[#allocation2 + $0xb0] sm:$0xff] %vm241, 0.0
          %265 = vst.msk [vmem:[#allocation2 + $0xb8] sm:$0xff] %vm241, 0.0
          %266 = vst.msk [vmem:[#allocation2 + $0xc0] sm:$0xff] %vm241, 0.0
          %267 = vst.msk [vmem:[#allocation2 + $0xc8] sm:$0xff] %vm241, 0.0
          %268 = vst.msk [vmem:[#allocation2 + $0xd0] sm:$0xff] %vm241, 0.0
          %269 = vst.msk [vmem:[#allocation2 + $0xd8] sm:$0xff] %vm241, 0.0
          %270 = vst.msk [vmem:[#allocation2 + $0xe0] sm:$0xff] %vm241, 0.0
          %271 = vst.msk [vmem:[#allocation2 + $0xe8] sm:$0xff] %vm241, 0.0
          %272 = vst.msk [vmem:[#allocation2 + $0xf0] sm:$0xff] %vm241, 0.0
          %273 = vst.msk [vmem:[#allocation2 + $0xf8] sm:$0xff] %vm241, 0.0
        $region36: #{tpu_custom_call.1} parent=27 // pred_fallthru
          _
        %v274 = vld [vmem:[#allocation2] sm:$0xff]
        %v275 = vld [vmem:[#allocation2 + $0x8] sm:$0xff]
        %v276 = vld [vmem:[#allocation2 + $0x10] sm:$0xff]
        %v277 = vld [vmem:[#allocation2 + $0x18] sm:$0xff]
        %v278 = vld [vmem:[#allocation2 + $0x20] sm:$0xff]
        %v279 = vld [vmem:[#allocation2 + $0x28] sm:$0xff]
        %v280 = vld [vmem:[#allocation2 + $0x30] sm:$0xff]
        %v281 = vld [vmem:[#allocation2 + $0x38] sm:$0xff]
        %v282 = vld [vmem:[#allocation2 + $0x40] sm:$0xff]
        %v283 = vld [vmem:[#allocation2 + $0x48] sm:$0xff]
        %v284 = vld [vmem:[#allocation2 + $0x50] sm:$0xff]
        %v285 = vld [vmem:[#allocation2 + $0x58] sm:$0xff]
        %v286 = vld [vmem:[#allocation2 + $0x60] sm:$0xff]
        %v287 = vld [vmem:[#allocation2 + $0x68] sm:$0xff]
        %v288 = vld [vmem:[#allocation2 + $0x70] sm:$0xff]
        %v289 = vld [vmem:[#allocation2 + $0x78] sm:$0xff]
        %v290 = vld [vmem:[#allocation2 + $0x80] sm:$0xff]
        %v291 = vld [vmem:[#allocation2 + $0x88] sm:$0xff]
        %v292 = vld [vmem:[#allocation2 + $0x90] sm:$0xff]
        %v293 = vld [vmem:[#allocation2 + $0x98] sm:$0xff]
        %v294 = vld [vmem:[#allocation2 + $0xa0] sm:$0xff]
        %v295 = vld [vmem:[#allocation2 + $0xa8] sm:$0xff]
        %v296 = vld [vmem:[#allocation2 + $0xb0] sm:$0xff]
        %v297 = vld [vmem:[#allocation2 + $0xb8] sm:$0xff]
        %v298 = vld [vmem:[#allocation2 + $0xc0] sm:$0xff]
        %v299 = vld [vmem:[#allocation2 + $0xc8] sm:$0xff]
        %v300 = vld [vmem:[#allocation2 + $0xd0] sm:$0xff]
        %v301 = vld [vmem:[#allocation2 + $0xd8] sm:$0xff]
        %v302 = vld [vmem:[#allocation2 + $0xe0] sm:$0xff]
        %v303 = vld [vmem:[#allocation2 + $0xe8] sm:$0xff]
        %v304 = vld [vmem:[#allocation2 + $0xf0] sm:$0xff]
        %v305 = vld [vmem:[#allocation2 + $0xf8] sm:$0xff]
        %v306 = vld [vmem:[%s187] sm:$0xff]
        %v307 = vld [vmem:[%s187 + $0x8] sm:$0xff]
        %v308 = vld [vmem:[%s187 + $0x10] sm:$0xff]
        %v309 = vld [vmem:[%s187 + $0x18] sm:$0xff]
        %v310 = vld [vmem:[%s187 + $0x20] sm:$0xff]
        %v311 = vld [vmem:[%s187 + $0x28] sm:$0xff]
        %v312 = vld [vmem:[%s187 + $0x30] sm:$0xff]
        %v313 = vld [vmem:[%s187 + $0x38] sm:$0xff]
        %v314 = vld [vmem:[%s187 + $0x40] sm:$0xff]
        %v315 = vld [vmem:[%s187 + $0x48] sm:$0xff]
        %v316 = vld [vmem:[%s187 + $0x50] sm:$0xff]
        %v317 = vld [vmem:[%s187 + $0x58] sm:$0xff]
        %v318 = vld [vmem:[%s187 + $0x60] sm:$0xff]
        %v319 = vld [vmem:[%s187 + $0x68] sm:$0xff]
        %v320 = vld [vmem:[%s187 + $0x70] sm:$0xff]
        %v321 = vld [vmem:[%s187 + $0x78] sm:$0xff]
        %v322 = vld [vmem:[%s187 + $0x80] sm:$0xff]
        %v323 = vld [vmem:[%s187 + $0x88] sm:$0xff]
        %v324 = vld [vmem:[%s187 + $0x90] sm:$0xff]
        %v325 = vld [vmem:[%s187 + $0x98] sm:$0xff]
        %v326 = vld [vmem:[%s187 + $0xa0] sm:$0xff]
        %v327 = vld [vmem:[%s187 + $0xa8] sm:$0xff]
        %v328 = vld [vmem:[%s187 + $0xb0] sm:$0xff]
        %v329 = vld [vmem:[%s187 + $0xb8] sm:$0xff]
        %v330 = vld [vmem:[%s187 + $0xc0] sm:$0xff]
        %v331 = vld [vmem:[%s187 + $0xc8] sm:$0xff]
        %v332 = vld [vmem:[%s187 + $0xd0] sm:$0xff]
        %v333 = vld [vmem:[%s187 + $0xd8] sm:$0xff]
        %v334 = vld [vmem:[%s187 + $0xe0] sm:$0xff]
        %v335 = vld [vmem:[%s187 + $0xe8] sm:$0xff]
        %v336 = vld [vmem:[%s187 + $0xf0] sm:$0xff]
        %v337 = vld [vmem:[%s187 + $0xf8] sm:$0xff]
        %v338 = vld [vmem:[%s229] sm:$0xf]
        %v339 = vld [vmem:[%s229 + $0x4] sm:$0xf]
        %v340 = vld [vmem:[%s229 + $0x8] sm:$0xf]
        %v341 = vld [vmem:[%s229 + $0xc] sm:$0xf]
        %v342 = vld [vmem:[%s229 + $0x10] sm:$0xf]
        %v343 = vld [vmem:[%s229 + $0x14] sm:$0xf]
        %v344 = vld [vmem:[%s229 + $0x18] sm:$0xf]
        %v345 = vld [vmem:[%s229 + $0x1c] sm:$0xf]
        %v346 = vld [vmem:[%s229 + $0x20] sm:$0xf]
        %v347 = vld [vmem:[%s229 + $0x24] sm:$0xf]
        %v348 = vld [vmem:[%s229 + $0x28] sm:$0xf]
        %v349 = vld [vmem:[%s229 + $0x2c] sm:$0xf]
        %v350 = vld [vmem:[%s229 + $0x30] sm:$0xf]
        %v351 = vld [vmem:[%s229 + $0x34] sm:$0xf]
        %v352 = vld [vmem:[%s229 + $0x38] sm:$0xf]
        %v353 = vld [vmem:[%s229 + $0x3c] sm:$0xf]
        %v354 = vld [vmem:[%s229 + $0x40] sm:$0xf]
        %v355 = vld [vmem:[%s229 + $0x44] sm:$0xf]
        %v356 = vld [vmem:[%s229 + $0x48] sm:$0xf]
        %v357 = vld [vmem:[%s229 + $0x4c] sm:$0xf]
        %v358 = vld [vmem:[%s229 + $0x50] sm:$0xf]
        %v359 = vld [vmem:[%s229 + $0x54] sm:$0xf]
        %v360 = vld [vmem:[%s229 + $0x58] sm:$0xf]
        %v361 = vld [vmem:[%s229 + $0x5c] sm:$0xf]
        %v362 = vld [vmem:[%s229 + $0x60] sm:$0xf]
        %v363 = vld [vmem:[%s229 + $0x64] sm:$0xf]
        %v364 = vld [vmem:[%s229 + $0x68] sm:$0xf]
        %v365 = vld [vmem:[%s229 + $0x6c] sm:$0xf]
        %v366 = vld [vmem:[%s229 + $0x70] sm:$0xf]
        %v367 = vld [vmem:[%s229 + $0x74] sm:$0xf]
        %v368 = vld [vmem:[%s229 + $0x78] sm:$0xf]
        %v369 = vld [vmem:[%s229 + $0x7c] sm:$0xf]
        %v402 = vunpack.c.l.b16 %v306
        %v403 = vunpack.c.h.b16 %v306
        %v404 = vunpack.c.l.b16 %v307
        %v405 = vunpack.c.h.b16 %v307
        %v406 = vunpack.c.l.b16 %v308
        %v407 = vunpack.c.h.b16 %v308
        %v408 = vunpack.c.l.b16 %v309
        %v409 = vunpack.c.h.b16 %v309
        %v410 = vunpack.c.l.b16 %v310
        %v411 = vunpack.c.h.b16 %v310
        %v412 = vunpack.c.l.b16 %v311
        %v413 = vunpack.c.h.b16 %v311
        %v414 = vunpack.c.l.b16 %v312
        %v415 = vunpack.c.h.b16 %v312
        %v416 = vunpack.c.l.b16 %v313
        %v417 = vunpack.c.h.b16 %v313
        %v418 = vunpack.c.l.b16 %v314
        %v419 = vunpack.c.h.b16 %v314
        %v420 = vunpack.c.l.b16 %v315
        %v421 = vunpack.c.h.b16 %v315
        %v422 = vunpack.c.l.b16 %v316
        %v423 = vunpack.c.h.b16 %v316
        %v424 = vunpack.c.l.b16 %v317
        %v425 = vunpack.c.h.b16 %v317
        %v426 = vunpack.c.l.b16 %v318
        %v427 = vunpack.c.h.b16 %v318
        %v428 = vunpack.c.l.b16 %v319
        %v429 = vunpack.c.h.b16 %v319
        %v430 = vunpack.c.l.b16 %v320
        %v431 = vunpack.c.h.b16 %v320
        %v432 = vunpack.c.l.b16 %v321
        %v433 = vunpack.c.h.b16 %v321
        %v434 = vunpack.c.l.b16 %v322
        %v435 = vunpack.c.h.b16 %v322
        %v436 = vunpack.c.l.b16 %v323
        %v437 = vunpack.c.h.b16 %v323
        %v438 = vunpack.c.l.b16 %v324
        %v439 = vunpack.c.h.b16 %v324
        %v440 = vunpack.c.l.b16 %v325
        %v441 = vunpack.c.h.b16 %v325
        %v442 = vunpack.c.l.b16 %v326
        %v443 = vunpack.c.h.b16 %v326
        %v444 = vunpack.c.l.b16 %v327
        %v445 = vunpack.c.h.b16 %v327
        %v446 = vunpack.c.l.b16 %v328
        %v447 = vunpack.c.h.b16 %v328
        %v448 = vunpack.c.l.b16 %v329
        %v449 = vunpack.c.h.b16 %v329
        %v450 = vunpack.c.l.b16 %v330
        %v451 = vunpack.c.h.b16 %v330
        %v452 = vunpack.c.l.b16 %v331
        %v453 = vunpack.c.h.b16 %v331
        %v454 = vunpack.c.l.b16 %v332
        %v455 = vunpack.c.h.b16 %v332
        %v456 = vunpack.c.l.b16 %v333
        %v457 = vunpack.c.h.b16 %v333
        %v458 = vunpack.c.l.b16 %v334
        %v459 = vunpack.c.h.b16 %v334
        %v460 = vunpack.c.l.b16 %v335
        %v461 = vunpack.c.h.b16 %v335
        %v462 = vunpack.c.l.b16 %v336
        %v463 = vunpack.c.h.b16 %v336
        %v464 = vunpack.c.l.b16 %v337
        %v465 = vunpack.c.h.b16 %v337
        %v466 = vpack.c.b16 %v404, %v402
        %v467 = vpack.c.b16 %v405, %v403
        %v468 = vpack.c.b16 %v408, %v406
        %v469 = vpack.c.b16 %v409, %v407
        %v470 = vpack.c.b16 %v412, %v410
        %v471 = vpack.c.b16 %v413, %v411
        %v472 = vpack.c.b16 %v416, %v414
        %v473 = vpack.c.b16 %v417, %v415
        %v474 = vpack.c.b16 %v420, %v418
        %v475 = vpack.c.b16 %v421, %v419
        %v476 = vpack.c.b16 %v424, %v422
        %v477 = vpack.c.b16 %v425, %v423
        %v478 = vpack.c.b16 %v428, %v426
        %v479 = vpack.c.b16 %v429, %v427
        %v480 = vpack.c.b16 %v432, %v430
        %v481 = vpack.c.b16 %v433, %v431
        %v482 = vpack.c.b16 %v436, %v434
        %v483 = vpack.c.b16 %v437, %v435
        %v484 = vpack.c.b16 %v440, %v438
        %v485 = vpack.c.b16 %v441, %v439
        %v486 = vpack.c.b16 %v444, %v442
        %v487 = vpack.c.b16 %v445, %v443
        %v488 = vpack.c.b16 %v448, %v446
        %v489 = vpack.c.b16 %v449, %v447
        %v490 = vpack.c.b16 %v452, %v450
        %v491 = vpack.c.b16 %v453, %v451
        %v492 = vpack.c.b16 %v456, %v454
        %v493 = vpack.c.b16 %v457, %v455
        %v494 = vpack.c.b16 %v460, %v458
        %v495 = vpack.c.b16 %v461, %v459
        %v496 = vpack.c.b16 %v464, %v462
        %v497 = vpack.c.b16 %v465, %v463
        %v562 = vunpack.c.l.b16 %v338
        %v563 = vunpack.c.l.b16 %v339
        %v564 = vunpack.c.l.b16 %v340
        %v565 = vunpack.c.l.b16 %v341
        %v566 = vunpack.c.l.b16 %v342
        %v567 = vunpack.c.l.b16 %v343
        %v568 = vunpack.c.l.b16 %v344
        %v569 = vunpack.c.l.b16 %v345
        %v570 = vunpack.c.l.b16 %v346
        %v571 = vunpack.c.l.b16 %v347
        %v572 = vunpack.c.l.b16 %v348
        %v573 = vunpack.c.l.b16 %v349
        %v574 = vunpack.c.l.b16 %v350
        %v575 = vunpack.c.l.b16 %v351
        %v576 = vunpack.c.l.b16 %v352
        %v577 = vunpack.c.l.b16 %v353
        %v578 = vunpack.c.l.b16 %v354
        %v579 = vunpack.c.l.b16 %v355
        %v580 = vunpack.c.l.b16 %v356
        %v581 = vunpack.c.l.b16 %v357
        %v582 = vunpack.c.l.b16 %v358
        %v583 = vunpack.c.l.b16 %v359
        %v584 = vunpack.c.l.b16 %v360
        %v585 = vunpack.c.l.b16 %v361
        %v586 = vunpack.c.l.b16 %v362
        %v587 = vunpack.c.l.b16 %v363
        %v588 = vunpack.c.l.b16 %v364
        %v589 = vunpack.c.l.b16 %v365
        %v590 = vunpack.c.l.b16 %v366
        %v591 = vunpack.c.l.b16 %v367
        %v592 = vunpack.c.l.b16 %v368
        %v593 = vunpack.c.l.b16 %v369
        %v594 = vpack.c.b16 %v563, %v562
        %v595 = vpack.c.b16 %v565, %v564
        %v596 = vpack.c.b16 %v567, %v566
        %v597 = vpack.c.b16 %v569, %v568
        %v598 = vpack.c.b16 %v571, %v570
        %v599 = vpack.c.b16 %v573, %v572
        %v600 = vpack.c.b16 %v575, %v574
        %v601 = vpack.c.b16 %v577, %v576
        %v602 = vpack.c.b16 %v579, %v578
        %v603 = vpack.c.b16 %v581, %v580
        %v604 = vpack.c.b16 %v583, %v582
        %v605 = vpack.c.b16 %v585, %v584
        %v606 = vpack.c.b16 %v587, %v586
        %v607 = vpack.c.b16 %v589, %v588
        %v608 = vpack.c.b16 %v591, %v590
        %v609 = vpack.c.b16 %v593, %v592
        %626 = vmatprep.subr.bf16.mxu0 0
        %627 = vmatpush1.bf16.msra.mxu0 %v601
        %628 = vmatprep.subr.bf16.mxu0 0
        %629 = vmatpush1.bf16.msra.mxu0 %v600
        %630 = vmatprep.subr.bf16.mxu0 0
        %631 = vmatpush1.bf16.msra.mxu0 %v599
        %632 = vmatprep.subr.bf16.mxu0 0
        %633 = vmatpush1.bf16.msra.mxu0 %v598
        %634 = vmatprep.subr.bf16.mxu0 0
        %635 = vmatpush1.bf16.msra.mxu0 %v597
        %636 = vmatprep.subr.bf16.mxu0 0
        %637 = vmatpush1.bf16.msra.mxu0 %v596
        %638 = vmatprep.subr.bf16.mxu0 0
        %639 = vmatpush1.bf16.msra.mxu0 %v595
        %640 = vmatprep.subr.bf16.mxu0 0
        %641 = vmatpush1.bf16.msra.mxu0 %v594
        %642 = vmatprep.subr.bf16.mxu0 0
        %643 = vmatpush2.bf16.msra.mxu0 %v609
        %644 = vmatprep.subr.bf16.mxu0 0
        %645 = vmatpush2.bf16.msra.mxu0 %v608
        %646 = vmatprep.subr.bf16.mxu0 0
        %647 = vmatpush2.bf16.msra.mxu0 %v607
        %648 = vmatprep.subr.bf16.mxu0 0
        %649 = vmatpush2.bf16.msra.mxu0 %v606
        %650 = vmatprep.subr.bf16.mxu0 0
        %651 = vmatpush2.bf16.msra.mxu0 %v605
        %652 = vmatprep.subr.bf16.mxu0 0
        %653 = vmatpush2.bf16.msra.mxu0 %v604
        %654 = vmatprep.subr.bf16.mxu0 0
        %655 = vmatpush2.bf16.msra.mxu0 %v603
        %656 = vmatprep.subr.bf16.mxu0 0
        %657 = vmatpush2.bf16.msra.mxu0 %v602
        %658 = vmatprep.mubr.bf16.mxu0 %v467
        %659 = vmatmul.mubr.bf16.gmra.mxu0 %v466
        %v660 = vpop.f32.mrf.mxu0
        %v661 = vadd.f32 0.0, %v660
        %v662 = vpop.f32.mrf.mxu0
        %v663 = vpop.f32.mrf.mxu0
        %v664 = vadd.f32 0.0, %v663
        %v665 = vpop.f32.mrf.mxu0
        %666 = vmatprep.mubr.bf16.mxu0 %v469
        %667 = vmatmul.mubr.bf16.gmra.mxu0 %v468
        %v668 = vpop.f32.mrf.mxu0
        %v669 = vadd.f32 0.0, %v668
        %v670 = vpop.f32.mrf.mxu0
        %v671 = vpop.f32.mrf.mxu0
        %v672 = vadd.f32 0.0, %v671
        %v673 = vpop.f32.mrf.mxu0
        %674 = vmatprep.mubr.bf16.mxu0 %v471
        %675 = vmatmul.mubr.bf16.gmra.mxu0 %v470
        %v676 = vpop.f32.mrf.mxu0
        %v677 = vadd.f32 0.0, %v676
        %v678 = vpop.f32.mrf.mxu0
        %v679 = vpop.f32.mrf.mxu0
        %v680 = vadd.f32 0.0, %v679
        %v681 = vpop.f32.mrf.mxu0
        %682 = vmatprep.mubr.bf16.mxu0 %v473
        %683 = vmatmul.mubr.bf16.gmra.mxu0 %v472
        %v684 = vpop.f32.mrf.mxu0
        %v685 = vadd.f32 0.0, %v684
        %v686 = vpop.f32.mrf.mxu0
        %v687 = vpop.f32.mrf.mxu0
        %v688 = vadd.f32 0.0, %v687
        %v689 = vpop.f32.mrf.mxu0
        %690 = vmatprep.mubr.bf16.mxu0 %v475
        %691 = vmatmul.mubr.bf16.gmra.mxu0 %v474
        %v692 = vpop.f32.mrf.mxu0
        %v693 = vadd.f32 0.0, %v692
        %v694 = vpop.f32.mrf.mxu0
        %v695 = vpop.f32.mrf.mxu0
        %v696 = vadd.f32 0.0, %v695
        %v697 = vpop.f32.mrf.mxu0
        %698 = vmatprep.mubr.bf16.mxu0 %v477
        %699 = vmatmul.mubr.bf16.gmra.mxu0 %v476
        %v700 = vpop.f32.mrf.mxu0
        %v701 = vadd.f32 0.0, %v700
        %v702 = vpop.f32.mrf.mxu0
        %v703 = vpop.f32.mrf.mxu0
        %v704 = vadd.f32 0.0, %v703
        %v705 = vpop.f32.mrf.mxu0
        %706 = vmatprep.mubr.bf16.mxu0 %v479
        %707 = vmatmul.mubr.bf16.gmra.mxu0 %v478
        %v708 = vpop.f32.mrf.mxu0
        %v709 = vadd.f32 0.0, %v708
        %v710 = vpop.f32.mrf.mxu0
        %v711 = vpop.f32.mrf.mxu0
        %v712 = vadd.f32 0.0, %v711
        %v713 = vpop.f32.mrf.mxu0
        %714 = vmatprep.mubr.bf16.mxu0 %v481
        %715 = vmatmul.mubr.bf16.gmra.mxu0 %v480
        %v716 = vpop.f32.mrf.mxu0
        %v717 = vadd.f32 0.0, %v716
        %v718 = vpop.f32.mrf.mxu0
        %v719 = vpop.f32.mrf.mxu0
        %v720 = vadd.f32 0.0, %v719
        %v721 = vpop.f32.mrf.mxu0
        %722 = vmatprep.mubr.bf16.mxu0 %v483
        %723 = vmatmul.mubr.bf16.gmra.mxu0 %v482
        %v724 = vpop.f32.mrf.mxu0
        %v725 = vadd.f32 0.0, %v724
        %v726 = vpop.f32.mrf.mxu0
        %v727 = vpop.f32.mrf.mxu0
        %v728 = vadd.f32 0.0, %v727
        %v729 = vpop.f32.mrf.mxu0
        %730 = vmatprep.mubr.bf16.mxu0 %v485
        %731 = vmatmul.mubr.bf16.gmra.mxu0 %v484
        %v732 = vpop.f32.mrf.mxu0
        %v733 = vadd.f32 0.0, %v732
        %v734 = vpop.f32.mrf.mxu0
        %v735 = vpop.f32.mrf.mxu0
        %v736 = vadd.f32 0.0, %v735
        %v737 = vpop.f32.mrf.mxu0
        %738 = vmatprep.mubr.bf16.mxu0 %v487
        %739 = vmatmul.mubr.bf16.gmra.mxu0 %v486
        %v740 = vpop.f32.mrf.mxu0
        %v741 = vadd.f32 0.0, %v740
        %v742 = vpop.f32.mrf.mxu0
        %v743 = vpop.f32.mrf.mxu0
        %v744 = vadd.f32 0.0, %v743
        %v745 = vpop.f32.mrf.mxu0
        %746 = vmatprep.mubr.bf16.mxu0 %v489
        %747 = vmatmul.mubr.bf16.gmra.mxu0 %v488
        %v748 = vpop.f32.mrf.mxu0
        %v749 = vadd.f32 0.0, %v748
        %v750 = vpop.f32.mrf.mxu0
        %v751 = vpop.f32.mrf.mxu0
        %v752 = vadd.f32 0.0, %v751
        %v753 = vpop.f32.mrf.mxu0
        %754 = vmatprep.mubr.bf16.mxu0 %v491
        %755 = vmatmul.mubr.bf16.gmra.mxu0 %v490
        %v756 = vpop.f32.mrf.mxu0
        %v757 = vadd.f32 0.0, %v756
        %v758 = vpop.f32.mrf.mxu0
        %v759 = vpop.f32.mrf.mxu0
        %v760 = vadd.f32 0.0, %v759
        %v761 = vpop.f32.mrf.mxu0
        %762 = vmatprep.mubr.bf16.mxu0 %v493
        %763 = vmatmul.mubr.bf16.gmra.mxu0 %v492
        %v764 = vpop.f32.mrf.mxu0
        %v765 = vadd.f32 0.0, %v764
        %v766 = vpop.f32.mrf.mxu0
        %v767 = vpop.f32.mrf.mxu0
        %v768 = vadd.f32 0.0, %v767
        %v769 = vpop.f32.mrf.mxu0
        %770 = vmatprep.mubr.bf16.mxu0 %v495
        %771 = vmatmul.mubr.bf16.gmra.mxu0 %v494
        %v772 = vpop.f32.mrf.mxu0
        %v773 = vadd.f32 0.0, %v772
        %v774 = vpop.f32.mrf.mxu0
        %v775 = vpop.f32.mrf.mxu0
        %v776 = vadd.f32 0.0, %v775
        %v777 = vpop.f32.mrf.mxu0
        %778 = vmatprep.mubr.bf16.mxu0 %v497
        %779 = vmatmul.mubr.bf16.gmra.mxu0 %v496
        %v780 = vpop.f32.mrf.mxu0
        %v781 = vadd.f32 0.0, %v780
        %v782 = vpop.f32.mrf.mxu0
        %v783 = vpop.f32.mrf.mxu0
        %v784 = vadd.f32 0.0, %v783
        %v785 = vpop.f32.mrf.mxu0
        %786 = vdwg.mxu0
        %v787 = vadd.f32 %v274, %v661
        %v788 = vadd.f32 %v275, %v664
        %v789 = vadd.f32 %v276, %v669
        %v790 = vadd.f32 %v277, %v672
        %v791 = vadd.f32 %v278, %v677
        %v792 = vadd.f32 %v279, %v680
        %v793 = vadd.f32 %v280, %v685
        %v794 = vadd.f32 %v281, %v688
        %v795 = vadd.f32 %v282, %v693
        %v796 = vadd.f32 %v283, %v696
        %v797 = vadd.f32 %v284, %v701
        %v798 = vadd.f32 %v285, %v704
        %v799 = vadd.f32 %v286, %v709
        %v800 = vadd.f32 %v287, %v712
        %v801 = vadd.f32 %v288, %v717
        %v802 = vadd.f32 %v289, %v720
        %v803 = vadd.f32 %v290, %v725
        %v804 = vadd.f32 %v291, %v728
        %v805 = vadd.f32 %v292, %v733
        %v806 = vadd.f32 %v293, %v736
        %v807 = vadd.f32 %v294, %v741
        %v808 = vadd.f32 %v295, %v744
        %v809 = vadd.f32 %v296, %v749
        %v810 = vadd.f32 %v297, %v752
        %v811 = vadd.f32 %v298, %v757
        %v812 = vadd.f32 %v299, %v760
        %v813 = vadd.f32 %v300, %v765
        %v814 = vadd.f32 %v301, %v768
        %v815 = vadd.f32 %v302, %v773
        %v816 = vadd.f32 %v303, %v776
        %v817 = vadd.f32 %v304, %v781
        %v818 = vadd.f32 %v305, %v784
        %vm819 = vcmask 523264
        %820 = vst.msk [vmem:[#allocation2] sm:$0xff] %vm819, %v787
        %821 = vst.msk [vmem:[#allocation2 + $0x8] sm:$0xff] %vm819, %v788
        %822 = vst.msk [vmem:[#allocation2 + $0x10] sm:$0xff] %vm819, %v789
        %823 = vst.msk [vmem:[#allocation2 + $0x18] sm:$0xff] %vm819, %v790
        %824 = vst.msk [vmem:[#allocation2 + $0x20] sm:$0xff] %vm819, %v791
        %825 = vst.msk [vmem:[#allocation2 + $0x28] sm:$0xff] %vm819, %v792
        %826 = vst.msk [vmem:[#allocation2 + $0x30] sm:$0xff] %vm819, %v793
        %827 = vst.msk [vmem:[#allocation2 + $0x38] sm:$0xff] %vm819, %v794
        %828 = vst.msk [vmem:[#allocation2 + $0x40] sm:$0xff] %vm819, %v795
        %829 = vst.msk [vmem:[#allocation2 + $0x48] sm:$0xff] %vm819, %v796
        %830 = vst.msk [vmem:[#allocation2 + $0x50] sm:$0xff] %vm819, %v797
        %831 = vst.msk [vmem:[#allocation2 + $0x58] sm:$0xff] %vm819, %v798
        %832 = vst.msk [vmem:[#allocation2 + $0x60] sm:$0xff] %vm819, %v799
        %833 = vst.msk [vmem:[#allocation2 + $0x68] sm:$0xff] %vm819, %v800
        %834 = vst.msk [vmem:[#allocation2 + $0x70] sm:$0xff] %vm819, %v801
        %835 = vst.msk [vmem:[#allocation2 + $0x78] sm:$0xff] %vm819, %v802
        %836 = vst.msk [vmem:[#allocation2 + $0x80] sm:$0xff] %vm819, %v803
        %837 = vst.msk [vmem:[#allocation2 + $0x88] sm:$0xff] %vm819, %v804
        %838 = vst.msk [vmem:[#allocation2 + $0x90] sm:$0xff] %vm819, %v805
        %839 = vst.msk [vmem:[#allocation2 + $0x98] sm:$0xff] %vm819, %v806
        %840 = vst.msk [vmem:[#allocation2 + $0xa0] sm:$0xff] %vm819, %v807
        %841 = vst.msk [vmem:[#allocation2 + $0xa8] sm:$0xff] %vm819, %v808
        %842 = vst.msk [vmem:[#allocation2 + $0xb0] sm:$0xff] %vm819, %v809
        %843 = vst.msk [vmem:[#allocation2 + $0xb8] sm:$0xff] %vm819, %v810
        %844 = vst.msk [vmem:[#allocation2 + $0xc0] sm:$0xff] %vm819, %v811
        %845 = vst.msk [vmem:[#allocation2 + $0xc8] sm:$0xff] %vm819, %v812
        %846 = vst.msk [vmem:[#allocation2 + $0xd0] sm:$0xff] %vm819, %v813
        %847 = vst.msk [vmem:[#allocation2 + $0xd8] sm:$0xff] %vm819, %v814
        %848 = vst.msk [vmem:[#allocation2 + $0xe0] sm:$0xff] %vm819, %v815
        %849 = vst.msk [vmem:[#allocation2 + $0xe8] sm:$0xff] %vm819, %v816
        %850 = vst.msk [vmem:[#allocation2 + $0xf0] sm:$0xff] %vm819, %v817
        %851 = vst.msk [vmem:[#allocation2 + $0xf8] sm:$0xff] %vm819, %v818
        // Predicated region
        $region37: #{tpu_custom_call.1} parent=27 // pred_check
          %p852 = pneg %p237
        $region38: #{tpu_custom_call.1} parent=27 // pred_check_branch
          %854 = sbr.rel (%p852) target = $region40
        $region39: #{tpu_custom_call.1} parent=27 // pred_region
          %v855 = vld [vmem:[#allocation2] sm:$0xff]
          %v856 = vld [vmem:[#allocation2 + $0x8] sm:$0xff]
          %v857 = vld [vmem:[#allocation2 + $0x10] sm:$0xff]
          %v858 = vld [vmem:[#allocation2 + $0x18] sm:$0xff]
          %v859 = vld [vmem:[#allocation2 + $0x20] sm:$0xff]
          %v860 = vld [vmem:[#allocation2 + $0x28] sm:$0xff]
          %v861 = vld [vmem:[#allocation2 + $0x30] sm:$0xff]
          %v862 = vld [vmem:[#allocation2 + $0x38] sm:$0xff]
          %v863 = vld [vmem:[#allocation2 + $0x40] sm:$0xff]
          %v864 = vld [vmem:[#allocation2 + $0x48] sm:$0xff]
          %v865 = vld [vmem:[#allocation2 + $0x50] sm:$0xff]
          %v866 = vld [vmem:[#allocation2 + $0x58] sm:$0xff]
          %v867 = vld [vmem:[#allocation2 + $0x60] sm:$0xff]
          %v868 = vld [vmem:[#allocation2 + $0x68] sm:$0xff]
          %v869 = vld [vmem:[#allocation2 + $0x70] sm:$0xff]
          %v870 = vld [vmem:[#allocation2 + $0x78] sm:$0xff]
          %v871 = vld [vmem:[#allocation2 + $0x80] sm:$0xff]
          %v872 = vld [vmem:[#allocation2 + $0x88] sm:$0xff]
          %v873 = vld [vmem:[#allocation2 + $0x90] sm:$0xff]
          %v874 = vld [vmem:[#allocation2 + $0x98] sm:$0xff]
          %v875 = vld [vmem:[#allocation2 + $0xa0] sm:$0xff]
          %v876 = vld [vmem:[#allocation2 + $0xa8] sm:$0xff]
          %v877 = vld [vmem:[#allocation2 + $0xb0] sm:$0xff]
          %v878 = vld [vmem:[#allocation2 + $0xb8] sm:$0xff]
          %v879 = vld [vmem:[#allocation2 + $0xc0] sm:$0xff]
          %v880 = vld [vmem:[#allocation2 + $0xc8] sm:$0xff]
          %v881 = vld [vmem:[#allocation2 + $0xd0] sm:$0xff]
          %v882 = vld [vmem:[#allocation2 + $0xd8] sm:$0xff]
          %v883 = vld [vmem:[#allocation2 + $0xe0] sm:$0xff]
          %v884 = vld [vmem:[#allocation2 + $0xe8] sm:$0xff]
          %v885 = vld [vmem:[#allocation2 + $0xf0] sm:$0xff]
          %v886 = vld [vmem:[#allocation2 + $0xf8] sm:$0xff]
          %887 = vst.msk [vmem:[%s214] sm:$0xff] %vm819, %v855
          %888 = vst.msk [vmem:[%s214 + $0x8] sm:$0xff] %vm819, %v856
          %889 = vst.msk [vmem:[%s214 + $0x10] sm:$0xff] %vm819, %v857
          %890 = vst.msk [vmem:[%s214 + $0x18] sm:$0xff] %vm819, %v858
          %891 = vst.msk [vmem:[%s214 + $0x20] sm:$0xff] %vm819, %v859
          %892 = vst.msk [vmem:[%s214 + $0x28] sm:$0xff] %vm819, %v860
          %893 = vst.msk [vmem:[%s214 + $0x30] sm:$0xff] %vm819, %v861
          %894 = vst.msk [vmem:[%s214 + $0x38] sm:$0xff] %vm819, %v862
          %895 = vst.msk [vmem:[%s214 + $0x40] sm:$0xff] %vm819, %v863
          %896 = vst.msk [vmem:[%s214 + $0x48] sm:$0xff] %vm819, %v864
          %897 = vst.msk [vmem:[%s214 + $0x50] sm:$0xff] %vm819, %v865
          %898 = vst.msk [vmem:[%s214 + $0x58] sm:$0xff] %vm819, %v866
          %899 = vst.msk [vmem:[%s214 + $0x60] sm:$0xff] %vm819, %v867
          %900 = vst.msk [vmem:[%s214 + $0x68] sm:$0xff] %vm819, %v868
          %901 = vst.msk [vmem:[%s214 + $0x70] sm:$0xff] %vm819, %v869
          %902 = vst.msk [vmem:[%s214 + $0x78] sm:$0xff] %vm819, %v870
          %903 = vst.msk [vmem:[%s214 + $0x80] sm:$0xff] %vm819, %v871
          %904 = vst.msk [vmem:[%s214 + $0x88] sm:$0xff] %vm819, %v872
          %905 = vst.msk [vmem:[%s214 + $0x90] sm:$0xff] %vm819, %v873
          %906 = vst.msk [vmem:[%s214 + $0x98] sm:$0xff] %vm819, %v874
          %907 = vst.msk [vmem:[%s214 + $0xa0] sm:$0xff] %vm819, %v875
          %908 = vst.msk [vmem:[%s214 + $0xa8] sm:$0xff] %vm819, %v876
          %909 = vst.msk [vmem:[%s214 + $0xb0] sm:$0xff] %vm819, %v877
          %910 = vst.msk [vmem:[%s214 + $0xb8] sm:$0xff] %vm819, %v878
          %911 = vst.msk [vmem:[%s214 + $0xc0] sm:$0xff] %vm819, %v879
          %912 = vst.msk [vmem:[%s214 + $0xc8] sm:$0xff] %vm819, %v880
          %913 = vst.msk [vmem:[%s214 + $0xd0] sm:$0xff] %vm819, %v881
          %914 = vst.msk [vmem:[%s214 + $0xd8] sm:$0xff] %vm819, %v882
          %915 = vst.msk [vmem:[%s214 + $0xe0] sm:$0xff] %vm819, %v883
          %916 = vst.msk [vmem:[%s214 + $0xe8] sm:$0xff] %vm819, %v884
          %917 = vst.msk [vmem:[%s214 + $0xf0] sm:$0xff] %vm819, %v885
          %918 = vst.msk [vmem:[%s214 + $0xf8] sm:$0xff] %vm819, %v886
        $region40: #{tpu_custom_call.1} parent=27 // pred_fallthru
          _
        %s919 = sand.u32 %s101, 1
        %s920 = sand.u32 %s101, 1
        %s921 = smul.addr %s920, 256
        %s922 = scalar_lea.vmem [#allocation5], %s921
        // Predicated region
        $region41: #{tpu_custom_call.1} parent=27 // pred_check
          %p923 = pneg %p111
        $region42: #{tpu_custom_call.1} parent=27 // pred_check_branch
          %925 = sbr.rel (%p923) target = $region44
        $region43: #{tpu_custom_call.1} parent=27 // pred_region
          %s926 = smul.u32 32, %s21
          %s927 = ssub.s32 43, %s926
          %p928 = scmp.lt.s32.totalorder %s927, 32
          %s929 = scalar_select %p928, %s927, 32
          %s930 = smul.u32 128, %s929
          %p931 = scmp.ne.s32.totalorder 0, %s930
          %s932 = sadd.s32 %s22, %s926
          %s933 = smul.addr %s932, 8
          %s934 = scalar_lea.vmem %s2, %s933
          // Predicated region
          $region45: #{tpu_custom_call.1} parent=43 // pred_check
            %p935 = pneg %p931
          $region46: #{tpu_custom_call.1} parent=43 // pred_check_branch
            %937 = sbr.rel (%p935) target = $region48
          $region47: #{tpu_custom_call.1} parent=43 // pred_region
            // Predicated region
            $region49: #{tpu_custom_call.1} parent=47 // pred_check
              _
            $region50: #{tpu_custom_call.1} parent=47 // pred_check_branch
              %939 = sbr.rel (0) target = $region52
            $region51: #{tpu_custom_call.1} parent=47 // pred_region
              // Predicated region
              $region71: #{tpu_custom_call.1} parent=51 // pred_check
                _
              $region72: #{tpu_custom_call.1} parent=51 // pred_check_branch
                %1051 = sbr.rel (0) target = $region74
              $region73: #{tpu_custom_call.1} parent=51 // pred_region
                %s1052 = sshrl.u32 %s929, 5
                // While loop
                $region75: #{tpu_custom_call.1} parent=73 // loop_pre_header
                  _
                $region76: #{tpu_custom_call.1} parent=73 // loop_header
                  %s1054 = sphi 0, %s1056
                  %p1055 = scmp.ge.s32.totalorder %s1054, %s1052
                  %s1059 = sphi 0, %s1128
                  %s1060 = sphi %s922, %s1131
                  %s1061 = sphi %s934, %s1132
                $region77: #{tpu_custom_call.1} parent=73 // loop_header_branch
                  %1058 = sbr.rel (%p1055) target = $region81
                $region78: #{tpu_custom_call.1} parent=73 // loop_body
                  %v1062 = vld [vmem:[%s1060] sm:$0xff]
                  %1063 = vst [vmem:[%s1061] sm:$0xff] %v1062
                  %v1064 = vld [vmem:[%s1060 + $0x8] sm:$0xff]
                  %1065 = vst [vmem:[%s1061 + $0x8] sm:$0xff] %v1064
                  %v1066 = vld [vmem:[%s1060 + $0x10] sm:$0xff]
                  %1067 = vst [vmem:[%s1061 + $0x10] sm:$0xff] %v1066
                  %v1068 = vld [vmem:[%s1060 + $0x18] sm:$0xff]
                  %1069 = vst [vmem:[%s1061 + $0x18] sm:$0xff] %v1068
                  %v1070 = vld [vmem:[%s1060 + $0x20] sm:$0xff]
                  %1071 = vst [vmem:[%s1061 + $0x20] sm:$0xff] %v1070
                  %v1072 = vld [vmem:[%s1060 + $0x28] sm:$0xff]
                  %1073 = vst [vmem:[%s1061 + $0x28] sm:$0xff] %v1072
                  %v1074 = vld [vmem:[%s1060 + $0x30] sm:$0xff]
                  %1075 = vst [vmem:[%s1061 + $0x30] sm:$0xff] %v1074
                  %v1076 = vld [vmem:[%s1060 + $0x38] sm:$0xff]
                  %1077 = vst [vmem:[%s1061 + $0x38] sm:$0xff] %v1076
                  %v1078 = vld [vmem:[%s1060 + $0x40] sm:$0xff]
                  %1079 = vst [vmem:[%s1061 + $0x40] sm:$0xff] %v1078
                  %v1080 = vld [vmem:[%s1060 + $0x48] sm:$0xff]
                  %1081 = vst [vmem:[%s1061 + $0x48] sm:$0xff] %v1080
                  %v1082 = vld [vmem:[%s1060 + $0x50] sm:$0xff]
                  %1083 = vst [vmem:[%s1061 + $0x50] sm:$0xff] %v1082
                  %v1084 = vld [vmem:[%s1060 + $0x58] sm:$0xff]
                  %1085 = vst [vmem:[%s1061 + $0x58] sm:$0xff] %v1084
                  %v1086 = vld [vmem:[%s1060 + $0x60] sm:$0xff]
                  %1087 = vst [vmem:[%s1061 + $0x60] sm:$0xff] %v1086
                  %v1088 = vld [vmem:[%s1060 + $0x68] sm:$0xff]
                  %1089 = vst [vmem:[%s1061 + $0x68] sm:$0xff] %v1088
                  %v1090 = vld [vmem:[%s1060 + $0x70] sm:$0xff]
                  %1091 = vst [vmem:[%s1061 + $0x70] sm:$0xff] %v1090
                  %v1092 = vld [vmem:[%s1060 + $0x78] sm:$0xff]
                  %1093 = vst [vmem:[%s1061 + $0x78] sm:$0xff] %v1092
                  %v1094 = vld [vmem:[%s1060 + $0x80] sm:$0xff]
                  %1095 = vst [vmem:[%s1061 + $0x80] sm:$0xff] %v1094
                  %v1096 = vld [vmem:[%s1060 + $0x88] sm:$0xff]
                  %1097 = vst [vmem:[%s1061 + $0x88] sm:$0xff] %v1096
                  %v1098 = vld [vmem:[%s1060 + $0x90] sm:$0xff]
                  %1099 = vst [vmem:[%s1061 + $0x90] sm:$0xff] %v1098
                  %v1100 = vld [vmem:[%s1060 + $0x98] sm:$0xff]
                  %1101 = vst [vmem:[%s1061 + $0x98] sm:$0xff] %v1100
                  %v1102 = vld [vmem:[%s1060 + $0xa0] sm:$0xff]
                  %1103 = vst [vmem:[%s1061 + $0xa0] sm:$0xff] %v1102
                  %v1104 = vld [vmem:[%s1060 + $0xa8] sm:$0xff]
                  %1105 = vst [vmem:[%s1061 + $0xa8] sm:$0xff] %v1104
                  %v1106 = vld [vmem:[%s1060 + $0xb0] sm:$0xff]
                  %1107 = vst [vmem:[%s1061 + $0xb0] sm:$0xff] %v1106
                  %v1108 = vld [vmem:[%s1060 + $0xb8] sm:$0xff]
                  %1109 = vst [vmem:[%s1061 + $0xb8] sm:$0xff] %v1108
                  %v1110 = vld [vmem:[%s1060 + $0xc0] sm:$0xff]
                  %1111 = vst [vmem:[%s1061 + $0xc0] sm:$0xff] %v1110
                  %v1112 = vld [vmem:[%s1060 + $0xc8] sm:$0xff]
                  %1113 = vst [vmem:[%s1061 + $0xc8] sm:$0xff] %v1112
                  %v1114 = vld [vmem:[%s1060 + $0xd0] sm:$0xff]
                  %1115 = vst [vmem:[%s1061 + $0xd0] sm:$0xff] %v1114
                  %v1116 = vld [vmem:[%s1060 + $0xd8] sm:$0xff]
                  %1117 = vst [vmem:[%s1061 + $0xd8] sm:$0xff] %v1116
                  %v1118 = vld [vmem:[%s1060 + $0xe0] sm:$0xff]
                  %1119 = vst [vmem:[%s1061 + $0xe0] sm:$0xff] %v1118
                  %v1120 = vld [vmem:[%s1060 + $0xe8] sm:$0xff]
                  %1121 = vst [vmem:[%s1061 + $0xe8] sm:$0xff] %v1120
                  %v1122 = vld [vmem:[%s1060 + $0xf0] sm:$0xff]
                  %1123 = vst [vmem:[%s1061 + $0xf0] sm:$0xff] %v1122
                  %v1124 = vld [vmem:[%s1060 + $0xf8] sm:$0xff]
                  %1125 = vst [vmem:[%s1061 + $0xf8] sm:$0xff] %v1124
                  %s1126 = sadd.s32 1, %s1059
                  %p1127 = scmp.ge.s32.totalorder %s1126, %s1052
                  %s1128 = scalar_select %p1127, 0, %s1126
                  %s1129 = smul.u32 %s1128, 256
                  %s1130 = smul.u32 %s1128, 256
                  %s1131 = scalar_lea.vmem %s922, %s1129 [#allocation5]
                  %s1132 = scalar_lea.vmem %s934, %s1130
                $region79: #{tpu_custom_call.1} parent=73 // loop_footer
                  %s1056 = sadd.s32 %s1054, 1
                $region80: #{tpu_custom_call.1} parent=73 // loop_footer_branch
                  %1053 = sbr.rel target = $region76
                $region81: #{tpu_custom_call.1} parent=73 // loop_exit
                  _
                %s1133 = sshrl.u32 %s929, 5
                %s1134 = sand.u32 %s929, 31
                %s1135 = smul.u32 %s1133, 32
                %s1136 = smul.u32 8, %s1135
                %s1137 = scalar_lea.vmem %s922, %s1136 [#allocation5]
                %s1138 = smul.u32 8, %s1135
                %s1139 = scalar_lea.vmem %s934, %s1138
                // While loop
                $region82: #{tpu_custom_call.1} parent=73 // loop_pre_header
                  _
                $region83: #{tpu_custom_call.1} parent=73 // loop_header
                  %s1141 = sphi 0, %s1143
                  %p1142 = scmp.ge.s32.totalorder %s1141, %s1134
                  %s1146 = sphi 0, %s1153
                  %s1147 = sphi %s1137, %s1156
                  %s1148 = sphi %s1139, %s1157
                $region84: #{tpu_custom_call.1} parent=73 // loop_header_branch
                  %1145 = sbr.rel (%p1142) target = $region88
                $region85: #{tpu_custom_call.1} parent=73 // loop_body
                  %v1149 = vld [vmem:[%s1147] sm:$0xff]
                  %1150 = vst [vmem:[%s1148] sm:$0xff] %v1149
                  %s1151 = sadd.s32 1, %s1146
                  %p1152 = scmp.ge.s32.totalorder %s1151, %s1134
                  %s1153 = scalar_select %p1152, 0, %s1151
                  %s1154 = smul.u32 %s1153, 8
                  %s1155 = smul.u32 %s1153, 8
                  %s1156 = scalar_lea.vmem %s1137, %s1154 [#allocation5]
                  %s1157 = scalar_lea.vmem %s1139, %s1155
                $region86: #{tpu_custom_call.1} parent=73 // loop_footer
                  %s1143 = sadd.s32 %s1141, 1
                $region87: #{tpu_custom_call.1} parent=73 // loop_footer_branch
                  %1140 = sbr.rel target = $region83
                $region88: #{tpu_custom_call.1} parent=73 // loop_exit
                  _
              $region74: #{tpu_custom_call.1} parent=51 // pred_fallthru
                _
              // Predicated region
              $region89: #{tpu_custom_call.1} parent=51 // pred_check
                _
              $region90: #{tpu_custom_call.1} parent=51 // pred_check_branch
                %1159 = sbr.rel target = $region92
              $region91: #{tpu_custom_call.1} parent=51 // pred_region
                _
              $region92: #{tpu_custom_call.1} parent=51 // pred_fallthru
                _
            $region52: #{tpu_custom_call.1} parent=47 // pred_fallthru
              _
            // Predicated region
            $region53: #{tpu_custom_call.1} parent=47 // pred_check
              _
            $region54: #{tpu_custom_call.1} parent=47 // pred_check_branch
              %941 = sbr.rel target = $region56
            $region55: #{tpu_custom_call.1} parent=47 // pred_region
              %s943 = ssub.s32 256, 1
              %s944 = sshrl.u32 %s929, 5
              // While loop
              $region57: #{tpu_custom_call.1} parent=55 // loop_pre_header
                _
              $region58: #{tpu_custom_call.1} parent=55 // loop_header
                %s946 = sphi 0, %s948
                %p947 = scmp.ge.s32.totalorder %s946, %s944
                %s951 = sphi 0, %s1020
                %s952 = sphi %s922, %s1023
                %s953 = sphi %s934, %s1024
              $region59: #{tpu_custom_call.1} parent=55 // loop_header_branch
                %950 = sbr.rel (%p947) target = $region63
              $region60: #{tpu_custom_call.1} parent=55 // loop_body
                %v954 = vld [vmem:[%s952] sm:%s943]
                %955 = vst [vmem:[%s953] sm:%s943] %v954
                %v956 = vld [vmem:[%s952 + $0x8] sm:%s943]
                %957 = vst [vmem:[%s953 + $0x8] sm:%s943] %v956
                %v958 = vld [vmem:[%s952 + $0x10] sm:%s943]
                %959 = vst [vmem:[%s953 + $0x10] sm:%s943] %v958
                %v960 = vld [vmem:[%s952 + $0x18] sm:%s943]
                %961 = vst [vmem:[%s953 + $0x18] sm:%s943] %v960
                %v962 = vld [vmem:[%s952 + $0x20] sm:%s943]
                %963 = vst [vmem:[%s953 + $0x20] sm:%s943] %v962
                %v964 = vld [vmem:[%s952 + $0x28] sm:%s943]
                %965 = vst [vmem:[%s953 + $0x28] sm:%s943] %v964
                %v966 = vld [vmem:[%s952 + $0x30] sm:%s943]
                %967 = vst [vmem:[%s953 + $0x30] sm:%s943] %v966
                %v968 = vld [vmem:[%s952 + $0x38] sm:%s943]
                %969 = vst [vmem:[%s953 + $0x38] sm:%s943] %v968
                %v970 = vld [vmem:[%s952 + $0x40] sm:%s943]
                %971 = vst [vmem:[%s953 + $0x40] sm:%s943] %v970
                %v972 = vld [vmem:[%s952 + $0x48] sm:%s943]
                %973 = vst [vmem:[%s953 + $0x48] sm:%s943] %v972
                %v974 = vld [vmem:[%s952 + $0x50] sm:%s943]
                %975 = vst [vmem:[%s953 + $0x50] sm:%s943] %v974
                %v976 = vld [vmem:[%s952 + $0x58] sm:%s943]
                %977 = vst [vmem:[%s953 + $0x58] sm:%s943] %v976
                %v978 = vld [vmem:[%s952 + $0x60] sm:%s943]
                %979 = vst [vmem:[%s953 + $0x60] sm:%s943] %v978
                %v980 = vld [vmem:[%s952 + $0x68] sm:%s943]
                %981 = vst [vmem:[%s953 + $0x68] sm:%s943] %v980
                %v982 = vld [vmem:[%s952 + $0x70] sm:%s943]
                %983 = vst [vmem:[%s953 + $0x70] sm:%s943] %v982
                %v984 = vld [vmem:[%s952 + $0x78] sm:%s943]
                %985 = vst [vmem:[%s953 + $0x78] sm:%s943] %v984
                %v986 = vld [vmem:[%s952 + $0x80] sm:%s943]
                %987 = vst [vmem:[%s953 + $0x80] sm:%s943] %v986
                %v988 = vld [vmem:[%s952 + $0x88] sm:%s943]
                %989 = vst [vmem:[%s953 + $0x88] sm:%s943] %v988
                %v990 = vld [vmem:[%s952 + $0x90] sm:%s943]
                %991 = vst [vmem:[%s953 + $0x90] sm:%s943] %v990
                %v992 = vld [vmem:[%s952 + $0x98] sm:%s943]
                %993 = vst [vmem:[%s953 + $0x98] sm:%s943] %v992
                %v994 = vld [vmem:[%s952 + $0xa0] sm:%s943]
                %995 = vst [vmem:[%s953 + $0xa0] sm:%s943] %v994
                %v996 = vld [vmem:[%s952 + $0xa8] sm:%s943]
                %997 = vst [vmem:[%s953 + $0xa8] sm:%s943] %v996
                %v998 = vld [vmem:[%s952 + $0xb0] sm:%s943]
                %999 = vst [vmem:[%s953 + $0xb0] sm:%s943] %v998
                %v1000 = vld [vmem:[%s952 + $0xb8] sm:%s943]
                %1001 = vst [vmem:[%s953 + $0xb8] sm:%s943] %v1000
                %v1002 = vld [vmem:[%s952 + $0xc0] sm:%s943]
                %1003 = vst [vmem:[%s953 + $0xc0] sm:%s943] %v1002
                %v1004 = vld [vmem:[%s952 + $0xc8] sm:%s943]
                %1005 = vst [vmem:[%s953 + $0xc8] sm:%s943] %v1004
                %v1006 = vld [vmem:[%s952 + $0xd0] sm:%s943]
                %1007 = vst [vmem:[%s953 + $0xd0] sm:%s943] %v1006
                %v1008 = vld [vmem:[%s952 + $0xd8] sm:%s943]
                %1009 = vst [vmem:[%s953 + $0xd8] sm:%s943] %v1008
                %v1010 = vld [vmem:[%s952 + $0xe0] sm:%s943]
                %1011 = vst [vmem:[%s953 + $0xe0] sm:%s943] %v1010
                %v1012 = vld [vmem:[%s952 + $0xe8] sm:%s943]
                %1013 = vst [vmem:[%s953 + $0xe8] sm:%s943] %v1012
                %v1014 = vld [vmem:[%s952 + $0xf0] sm:%s943]
                %1015 = vst [vmem:[%s953 + $0xf0] sm:%s943] %v1014
                %v1016 = vld [vmem:[%s952 + $0xf8] sm:%s943]
                %1017 = vst [vmem:[%s953 + $0xf8] sm:%s943] %v1016
                %s1018 = sadd.s32 1, %s951
                %p1019 = scmp.ge.s32.totalorder %s1018, %s944
                %s1020 = scalar_select %p1019, 0, %s1018
                %s1021 = smul.u32 %s1020, 256
                %s1022 = smul.u32 %s1020, 256
                %s1023 = scalar_lea.vmem %s922, %s1021 [#allocation5]
                %s1024 = scalar_lea.vmem %s934, %s1022
              $region61: #{tpu_custom_call.1} parent=55 // loop_footer
                %s948 = sadd.s32 %s946, 1
              $region62: #{tpu_custom_call.1} parent=55 // loop_footer_branch
                %945 = sbr.rel target = $region58
              $region63: #{tpu_custom_call.1} parent=55 // loop_exit
                _
              %s1025 = sshrl.u32 %s929, 5
              %s1026 = sand.u32 %s929, 31
              %s1027 = smul.u32 %s1025, 32
              %s1028 = smul.u32 8, %s1027
              %s1029 = scalar_lea.vmem %s922, %s1028 [#allocation5]
              %s1030 = smul.u32 8, %s1027
              %s1031 = scalar_lea.vmem %s934, %s1030
              // While loop
              $region64: #{tpu_custom_call.1} parent=55 // loop_pre_header
                _
              $region65: #{tpu_custom_call.1} parent=55 // loop_header
                %s1033 = sphi 0, %s1035
                %p1034 = scmp.ge.s32.totalorder %s1033, %s1026
                %s1038 = sphi 0, %s1045
                %s1039 = sphi %s1029, %s1048
                %s1040 = sphi %s1031, %s1049
              $region66: #{tpu_custom_call.1} parent=55 // loop_header_branch
                %1037 = sbr.rel (%p1034) target = $region70
              $region67: #{tpu_custom_call.1} parent=55 // loop_body
                %v1041 = vld [vmem:[%s1039] sm:%s943]
                %1042 = vst [vmem:[%s1040] sm:%s943] %v1041
                %s1043 = sadd.s32 1, %s1038
                %p1044 = scmp.ge.s32.totalorder %s1043, %s1026
                %s1045 = scalar_select %p1044, 0, %s1043
                %s1046 = smul.u32 %s1045, 8
                %s1047 = smul.u32 %s1045, 8
                %s1048 = scalar_lea.vmem %s1029, %s1046 [#allocation5]
                %s1049 = scalar_lea.vmem %s1031, %s1047
              $region68: #{tpu_custom_call.1} parent=55 // loop_footer
                %s1035 = sadd.s32 %s1033, 1
              $region69: #{tpu_custom_call.1} parent=55 // loop_footer_branch
                %1032 = sbr.rel target = $region65
              $region70: #{tpu_custom_call.1} parent=55 // loop_exit
                _
            $region56: #{tpu_custom_call.1} parent=47 // pred_fallthru
              _
          $region48: #{tpu_custom_call.1} parent=43 // pred_fallthru
            _
          %1160 = vnop
        $region44: #{tpu_custom_call.1} parent=27 // pred_fallthru
          _
      $region28: #{tpu_custom_call.1} parent=5 // pred_fallthru
        _
      %p1161 = scmp.le.s32.totalorder 2, %s11
      // Predicated region
      $region93: #{tpu_custom_call.1} parent=5 // pred_check
        %p1162 = pneg %p1161
      $region94: #{tpu_custom_call.1} parent=5 // pred_check_branch
        %1164 = sbr.rel (%p1162) target = $region96
      $region95: #{tpu_custom_call.1} parent=5 // pred_region
        %s1165 = ssub.s32 %s11, 2
        // Predicated region
        $region97: #{tpu_custom_call.1} parent=95 // pred_check
          %p1166 = pneg %p117
        $region98: #{tpu_custom_call.1} parent=95 // pred_check_branch
          %1168 = sbr.rel (%p1166) target = $region100
        $region99: #{tpu_custom_call.1} parent=95 // pred_region
          %s1169 = sand.u32 %s102, 1
          %s1170 = sand.u32 %s102, 1
          %s1171 = smul.addr %s1170, 256
          %s1172 = scalar_lea.vmem [#allocation5], %s1171
        $region100: #{tpu_custom_call.1} parent=95 // pred_fallthru
          _
      $region96: #{tpu_custom_call.1} parent=5 // pred_fallthru
        _
    $region6: #{tpu_custom_call.1} parent=1 // loop_footer
      %s15 = sadd.s32 1, %s11
    $region7: #{tpu_custom_call.1} parent=1 // loop_footer_branch
      %10 = sbr.rel target = $region3
    $region8: #{tpu_custom_call.1} parent=1 // loop_exit
      _
    %1173 = vsyncpa [#allocation4], 1
    %s1174 = scalar_lea.sflag [#allocation4], 1
    %1175 = vsyncpa %s1174, 1

</llo_original>
